<compile_context>
chip_gen: v7x
topology: tpu7x:2x2x1
jax: 0.10.0
libtpu: 0.0.40
codegen_flags: <defaults>
</compile_context>

<pallas_src>
import functools
import math

import jax
import jax.numpy as jnp
from jax import lax
from jax.experimental import pallas as pl
from jax.experimental.pallas import tpu as pltpu


_VMEM = pl.BlockSpec(memory_space=pltpu.MemorySpace.VMEM)
_LANES = 128  # lane-group width; each gate is padded to a multiple of this


# ----------------------------- fused kernel -------------------------------- #

def _fused_gru_head_kernel(*refs, num_layers, hp):
    """refs = (x0, [wg, b4] * num_layers, w1p, b1, w2, b2, out).

    x0:   [B, D0]       input at t = 0
    wg:   [Din, 3*hp]   fused gate weights; gate g lives in lanes
                        [g*hp, g*hp + H) (rest zero).  For layer > 0,
                        Din == hp (rows >= H are zero).
    b4:   [4, hp]       rows: (bih_r+bhh_r, bih_z+bhh_z, bih_n, bhh_n), zero-padded
    w1p:  [hp, L1]      head layer 1 (rows >= H zero),  b1: [1, L1]
    w2:   [L1, P]       head layer 2,                   b2: [1, P]
    out:  [B, P]
    """
    x_ref = refs[0]
    out_ref = refs[-1]
    w1_ref, b1_ref, w2_ref, b2_ref = refs[-5:-1]

    h = x_ref[...]                                            # [B, D0] -> [B, hp]
    for layer in range(num_layers):
        wg_ref = refs[1 + 2 * layer]
        b_ref = refs[2 + 2 * layer]
        # One fused gate matmul per layer (one MXU push instead of three).
        g = jnp.dot(h, wg_ref[...], preferred_element_type=jnp.float32)  # [B, 3*hp]
        b = b_ref[...]                                                   # [4, hp]
        r = jax.nn.sigmoid(g[:, 0:hp] + b[0:1])        # lane-group-aligned slices
        z = jax.nn.sigmoid(g[:, hp:2 * hp] + b[1:2])
        n = jnp.tanh(g[:, 2 * hp:3 * hp] + b[2:3] + r * b[3:4])
        h = (1.0 - z) * n                               # h_prev == 0 (zero init)
        # Padding lanes stay exactly 0: g=0, bias=0 -> z=0.5, n=tanh(0)=0 -> h=0,
        # and the next layer's padded weight rows are zero anyway.
        # TODO(synk): nn.GRU inter-layer dropout (training-mode only) omitted;
        # this implements inference / dropout=0 semantics.

    zed = jax.nn.sigmoid(
        jnp.dot(h, w1_ref[...], preferred_element_type=jnp.float32) + b1_ref[...])
    out_ref[...] = (
        jnp.dot(zed, w2_ref[...], preferred_element_type=jnp.float32) + b2_ref[...])


# --------------------- one-time parameter repacking ------------------------ #

def pack_params(params, *, hidden_size, num_layers):
    """Repack/pad weights ONCE at parameter-load time (not in the jitted forward)."""
    H = hidden_size
    hp = ((H + _LANES - 1) // _LANES) * _LANES          # per-gate lane-group width
    layers = []
    for layer in range(num_layers):
        wih_t, whh_t, bih, bhh = params["gru"][layer]
        del whh_t                                        # h0 == 0 => 0 @ W_hh == 0 at t=0
        d_in = wih_t.shape[0]
        d_in_pack = d_in if layer == 0 else hp           # deeper layers take padded h
        wg = jnp.zeros((d_in_pack, 3 * hp), jnp.float32)
        for g in range(3):
            wg = wg.at[:d_in, g * hp:g * hp + H].set(wih_t[:, g * H:(g + 1) * H])
        b4 = jnp.zeros((4, hp), jnp.float32)
        b4 = b4.at[0, :H].set(bih[0:H] + bhh[0:H])
        b4 = b4.at[1, :H].set(bih[H:2 * H] + bhh[H:2 * H])
        b4 = b4.at[2, :H].set(bih[2 * H:3 * H])
        b4 = b4.at[3, :H].set(bhh[2 * H:3 * H])
        layers.append((wg, b4))

    w1, b1 = params["lin1"]
    w2, b2 = params["lin2"]
    w1p = jnp.zeros((hp, w1.shape[1]), jnp.float32).at[:H, :].set(w1)
    return {
        "layers": layers,
        "w1": w1p, "b1": b1.reshape(1, -1),
        "w2": w2, "b2": b2.reshape(1, -1),
    }


# ------------------------------- forward ------------------------------------ #

@jax.jit
def simple_gru_forward(x, packed, h0=None):
    """x: [B, T, input_size] (batch_first), packed from pack_params -> [B, pred_steps]."""
    if h0 is not None:
        raise ValueError(
            "simple_gru_forward assumes nn.GRU's default zero initial hidden "
            "state (the fused kernel drops W_hh / the z*h_prev term at t=0).")

    num_layers = len(packed["layers"])
    hp = packed["layers"][0][1].shape[1]
    x0 = x[:, 0, :]                       # only t=0 reaches the head

    flat_inputs = [x0]
    for wg, b4 in packed["layers"]:
        flat_inputs += [wg, b4]
    flat_inputs += [packed["w1"], packed["b1"], packed["w2"], packed["b2"]]

    B = x.shape[0]
    P = packed["w2"].shape[1]
    kernel = functools.partial(_fused_gru_head_kernel, num_layers=num_layers, hp=hp)

    # NOTE: gridless single-program launch; all operands are <100 KiB so they
    # stay VMEM-resident on every TPU generation.  If B / H / linear_units ever
    # scale up: add a batch grid axis with dimension_semantics=("parallel",)
    # (2 TCs on v7x), tile weights for v7x's 64 MiB VMEM, pad B to a multiple
    # of 8 sublanes, and cast MXU operands to bf16 (keep f32 accumulation).
    # TODO(synk): at these shapes launch overhead may rival plain XLA fusion;
    # benchmark (xprof, min-of-N) before committing the custom kernel in prod.
    return pl.pallas_call(
        kernel,
        out_shape=jax.ShapeDtypeStruct((B, P), jnp.float32),
        in_specs=[_VMEM] * len(flat_inputs),
        out_specs=_VMEM,
    )(*flat_inputs)


# ------------------------ deterministic parameters ------------------------- #

def init_params(key, *, hidden_size, input_size, num_layers, pred_steps, linear_units):
    params = {"gru": []}
    k_gru = 1.0 / math.sqrt(hidden_size)
    for layer in range(num_layers):
        d_in = input_size if layer == 0 else hidden_size
        key, k1, k2, k3, k4 = jax.random.split(key, 5)
        wih_t = jax.random.uniform(k1, (d_in, 3 * hidden_size), jnp.float32, -k_gru, k_gru)
        whh_t = jax.random.uniform(k2, (hidden_size, 3 * hidden_size), jnp.float32, -k_gru, k_gru)
        bih = jax.random.uniform(k3, (3 * hidden_size,), jnp.float32, -k_gru, k_gru)
        bhh = jax.random.uniform(k4, (3 * hidden_size,), jnp.float32, -k_gru, k_gru)
        params["gru"].append((wih_t, whh_t, bih, bhh))

    key, k1, k2, k3, k4 = jax.random.split(key, 5)
    k_l1 = 1.0 / math.sqrt(hidden_size)
    w1 = jax.random.uniform(k1, (hidden_size, linear_units), jnp.float32, -k_l1, k_l1)
    b1 = jax.random.uniform(k2, (linear_units,), jnp.float32, -k_l1, k_l1)
    k_l2 = 1.0 / math.sqrt(linear_units)
    w2 = jax.random.uniform(k3, (linear_units, pred_steps), jnp.float32, -k_l2, k_l2)
    b2 = jax.random.uniform(k4, (pred_steps,), jnp.float32, -k_l2, k_l2)
    params["lin1"] = (w1, b1)
    params["lin2"] = (w2, b2)
    return params


# -------------------- pure-JAX reference (full T-step scan) ----------------- #

def reference_forward(x, params, *, hidden_size, num_layers):
    HI = jax.lax.Precision.HIGHEST
    out = jnp.transpose(x, (1, 0, 2))      # time-major [T, B, D]
    for layer in range(num_layers):
        wih_t, whh_t, bih, bhh = params["gru"][layer]
        H = hidden_size

        def step(h, x_t):
            gi = jnp.dot(x_t, wih_t, precision=HI) + bih
            gh = jnp.dot(h, whh_t, precision=HI) + bhh
            r = jax.nn.sigmoid(gi[:, :H] + gh[:, :H])
            z = jax.nn.sigmoid(gi[:, H:2 * H] + gh[:, H:2 * H])
            n = jnp.tanh(gi[:, 2 * H:] + r * gh[:, 2 * H:])
            h_new = (1.0 - z) * n + z * h
            return h_new, h_new

        h0 = jnp.zeros((out.shape[1], H), jnp.float32)
        _, out = lax.scan(step, h0, out)
    h_first = out[0]                        # == encoded[0][:, 0]
    w1, b1 = params["lin1"]
    w2, b2 = params["lin2"]
    zed = jax.nn.sigmoid(jnp.dot(h_first, w1, precision=HI) + b1)
    return jnp.dot(zed, w2, precision=HI) + b2


# --------------------------------- main ------------------------------------ #

if __name__ == "__main__":
    hidden_size = 32
    input_size = 16
    num_layers = 2
    pred_steps = 4
    linear_units = 32
    batch, seq = 2, 8

    key = jax.random.PRNGKey(0)
    key, kx = jax.random.split(key)
    x = jax.random.uniform(kx, (batch, seq, input_size), jnp.float32, -1.0, 1.0)

    params = init_params(
        key,
        hidden_size=hidden_size,
        input_size=input_size,
        num_layers=num_layers,
        pred_steps=pred_steps,
        linear_units=linear_units,
    )

    # One-time repack at parameter-load time (hoisted out of the forward path).
    packed = pack_params(params, hidden_size=hidden_size, num_layers=num_layers)

    pred = simple_gru_forward(x, packed)
    pred = jax.block_until_ready(pred)

    ref = reference_forward(
        x, params, hidden_size=hidden_size, num_layers=num_layers)
    ref = jax.block_until_ready(ref)

    assert pred.shape == (batch, pred_steps)
    assert jnp.allclose(pred, ref, atol=1e-5, rtol=1e-5), (pred, ref)

    print("KERNEL_OK")
</pallas_src>

<mosaic_0001>
module attributes {stable_mosaic.version = 11 : i64} {
  func.func @_fused_gru_head_kernel(%arg0: memref<2x16xf32, #tpu.memory_space<vmem>>, %arg1: memref<16x384xf32, #tpu.memory_space<vmem>>, %arg2: memref<4x128xf32, #tpu.memory_space<vmem>>, %arg3: memref<128x384xf32, #tpu.memory_space<vmem>>, %arg4: memref<4x128xf32, #tpu.memory_space<vmem>>, %arg5: memref<128x32xf32, #tpu.memory_space<vmem>>, %arg6: memref<1x32xf32, #tpu.memory_space<vmem>>, %arg7: memref<32x4xf32, #tpu.memory_space<vmem>>, %arg8: memref<1x4xf32, #tpu.memory_space<vmem>>, %arg9: memref<2x4xf32, #tpu.memory_space<vmem>>) attributes {dimension_semantics = [], scalar_prefetch = 0 : i64, scratch_operands = 0 : i64, tpu.core_type = #tpu.core_type<tc>} {
    %c0 = arith.constant 0 : index
    %c0_0 = arith.constant 0 : index
    %0 = vector.load %arg0[%c0, %c0_0] : memref<2x16xf32, #tpu.memory_space<vmem>>, vector<2x16xf32>
    %c0_1 = arith.constant 0 : index
    %c0_2 = arith.constant 0 : index
    %1 = vector.load %arg1[%c0_1, %c0_2] : memref<16x384xf32, #tpu.memory_space<vmem>>, vector<16x384xf32>
    %cst = arith.constant dense<0.000000e+00> : vector<2x384xf32>
    %2 = tpu.matmul %0, %1, %cst {dimension_numbers = #tpu.dot_dimension_numbers<[1], [0], [0], [1], [0, 0, 1, 1], [], []>} : vector<2x16xf32>, vector<16x384xf32>, vector<2x384xf32> -> vector<2x384xf32>
    %c0_3 = arith.constant 0 : index
    %c0_4 = arith.constant 0 : index
    %3 = vector.load %arg2[%c0_3, %c0_4] : memref<4x128xf32, #tpu.memory_space<vmem>>, vector<4x128xf32>
    %4 = vector.extract_strided_slice %2 {offsets = [0, 0], sizes = [2, 128], strides = [1, 1]} : vector<2x384xf32> to vector<2x128xf32>
    %5 = vector.extract_strided_slice %3 {offsets = [0, 0], sizes = [1, 128], strides = [1, 1]} : vector<4x128xf32> to vector<1x128xf32>
    %6 = vector.broadcast %5 : vector<1x128xf32> to vector<2x128xf32>
    %7 = arith.addf %4, %6 : vector<2x128xf32>
    %8 = arith.negf %7 : vector<2x128xf32>
    %9 = math.exp %8 : vector<2x128xf32>
    %cst_5 = arith.constant 1.000000e+00 : f32
    %10 = vector.broadcast %cst_5 : f32 to vector<2x128xf32>
    %11 = arith.addf %10, %9 : vector<2x128xf32>
    %12 = arith.divf %10, %11 : vector<2x128xf32>
    %13 = vector.extract_strided_slice %2 {offsets = [0, 128], sizes = [2, 128], strides = [1, 1]} : vector<2x384xf32> to vector<2x128xf32>
    %14 = vector.extract_strided_slice %3 {offsets = [1, 0], sizes = [1, 128], strides = [1, 1]} : vector<4x128xf32> to vector<1x128xf32>
    %15 = vector.broadcast %14 : vector<1x128xf32> to vector<2x128xf32>
    %16 = arith.addf %13, %15 : vector<2x128xf32>
    %17 = arith.negf %16 : vector<2x128xf32>
    %18 = math.exp %17 : vector<2x128xf32>
    %cst_6 = arith.constant 1.000000e+00 : f32
    %19 = vector.broadcast %cst_6 : f32 to vector<2x128xf32>
    %20 = arith.addf %19, %18 : vector<2x128xf32>
    %21 = arith.divf %19, %20 : vector<2x128xf32>
    %22 = vector.extract_strided_slice %2 {offsets = [0, 256], sizes = [2, 128], strides = [1, 1]} : vector<2x384xf32> to vector<2x128xf32>
    %23 = vector.extract_strided_slice %3 {offsets = [2, 0], sizes = [1, 128], strides = [1, 1]} : vector<4x128xf32> to vector<1x128xf32>
    %24 = vector.broadcast %23 : vector<1x128xf32> to vector<2x128xf32>
    %25 = arith.addf %22, %24 : vector<2x128xf32>
    %26 = vector.extract_strided_slice %3 {offsets = [3, 0], sizes = [1, 128], strides = [1, 1]} : vector<4x128xf32> to vector<1x128xf32>
    %27 = vector.broadcast %26 : vector<1x128xf32> to vector<2x128xf32>
    %28 = arith.mulf %12, %27 : vector<2x128xf32>
    %29 = arith.addf %25, %28 : vector<2x128xf32>
    %30 = math.tanh %29 : vector<2x128xf32>
    %cst_7 = arith.constant 1.000000e+00 : f32
    %31 = vector.broadcast %cst_7 : f32 to vector<2x128xf32>
    %32 = arith.subf %31, %21 : vector<2x128xf32>
    %33 = arith.mulf %32, %30 : vector<2x128xf32>
    %c0_8 = arith.constant 0 : index
    %c0_9 = arith.constant 0 : index
    %34 = vector.load %arg3[%c0_8, %c0_9] : memref<128x384xf32, #tpu.memory_space<vmem>>, vector<128x384xf32>
    %cst_10 = arith.constant dense<0.000000e+00> : vector<2x384xf32>
    %35 = tpu.matmul %33, %34, %cst_10 {dimension_numbers = #tpu.dot_dimension_numbers<[1], [0], [0], [1], [0, 0, 1, 1], [], []>} : vector<2x128xf32>, vector<128x384xf32>, vector<2x384xf32> -> vector<2x384xf32>
    %c0_11 = arith.constant 0 : index
    %c0_12 = arith.constant 0 : index
    %36 = vector.load %arg4[%c0_11, %c0_12] : memref<4x128xf32, #tpu.memory_space<vmem>>, vector<4x128xf32>
    %37 = vector.extract_strided_slice %35 {offsets = [0, 0], sizes = [2, 128], strides = [1, 1]} : vector<2x384xf32> to vector<2x128xf32>
    %38 = vector.extract_strided_slice %36 {offsets = [0, 0], sizes = [1, 128], strides = [1, 1]} : vector<4x128xf32> to vector<1x128xf32>
    %39 = vector.broadcast %38 : vector<1x128xf32> to vector<2x128xf32>
    %40 = arith.addf %37, %39 : vector<2x128xf32>
    %41 = arith.negf %40 : vector<2x128xf32>
    %42 = math.exp %41 : vector<2x128xf32>
    %cst_13 = arith.constant 1.000000e+00 : f32
    %43 = vector.broadcast %cst_13 : f32 to vector<2x128xf32>
    %44 = arith.addf %43, %42 : vector<2x128xf32>
    %45 = arith.divf %43, %44 : vector<2x128xf32>
    %46 = vector.extract_strided_slice %35 {offsets = [0, 128], sizes = [2, 128], strides = [1, 1]} : vector<2x384xf32> to vector<2x128xf32>
    %47 = vector.extract_strided_slice %36 {offsets = [1, 0], sizes = [1, 128], strides = [1, 1]} : vector<4x128xf32> to vector<1x128xf32>
    %48 = vector.broadcast %47 : vector<1x128xf32> to vector<2x128xf32>
    %49 = arith.addf %46, %48 : vector<2x128xf32>
    %50 = arith.negf %49 : vector<2x128xf32>
    %51 = math.exp %50 : vector<2x128xf32>
    %cst_14 = arith.constant 1.000000e+00 : f32
    %52 = vector.broadcast %cst_14 : f32 to vector<2x128xf32>
    %53 = arith.addf %52, %51 : vector<2x128xf32>
    %54 = arith.divf %52, %53 : vector<2x128xf32>
    %55 = vector.extract_strided_slice %35 {offsets = [0, 256], sizes = [2, 128], strides = [1, 1]} : vector<2x384xf32> to vector<2x128xf32>
    %56 = vector.extract_strided_slice %36 {offsets = [2, 0], sizes = [1, 128], strides = [1, 1]} : vector<4x128xf32> to vector<1x128xf32>
    %57 = vector.broadcast %56 : vector<1x128xf32> to vector<2x128xf32>
    %58 = arith.addf %55, %57 : vector<2x128xf32>
    %59 = vector.extract_strided_slice %36 {offsets = [3, 0], sizes = [1, 128], strides = [1, 1]} : vector<4x128xf32> to vector<1x128xf32>
    %60 = vector.broadcast %59 : vector<1x128xf32> to vector<2x128xf32>
    %61 = arith.mulf %45, %60 : vector<2x128xf32>
    %62 = arith.addf %58, %61 : vector<2x128xf32>
    %63 = math.tanh %62 : vector<2x128xf32>
    %cst_15 = arith.constant 1.000000e+00 : f32
    %64 = vector.broadcast %cst_15 : f32 to vector<2x128xf32>
    %65 = arith.subf %64, %54 : vector<2x128xf32>
    %66 = arith.mulf %65, %63 : vector<2x128xf32>
    %c0_16 = arith.constant 0 : index
    %c0_17 = arith.constant 0 : index
    %67 = vector.load %arg5[%c0_16, %c0_17] : memref<128x32xf32, #tpu.memory_space<vmem>>, vector<128x32xf32>
    %cst_18 = arith.constant dense<0.000000e+00> : vector<2x32xf32>
    %68 = tpu.matmul %66, %67, %cst_18 {dimension_numbers = #tpu.dot_dimension_numbers<[1], [0], [0], [1], [0, 0, 1, 1], [], []>} : vector<2x128xf32>, vector<128x32xf32>, vector<2x32xf32> -> vector<2x32xf32>
    %c0_19 = arith.constant 0 : index
    %c0_20 = arith.constant 0 : index
    %69 = vector.load %arg6[%c0_19, %c0_20] : memref<1x32xf32, #tpu.memory_space<vmem>>, vector<1x32xf32>
    %70 = vector.broadcast %69 : vector<1x32xf32> to vector<2x32xf32>
    %71 = arith.addf %68, %70 : vector<2x32xf32>
    %72 = arith.negf %71 : vector<2x32xf32>
    %73 = math.exp %72 : vector<2x32xf32>
    %cst_21 = arith.constant 1.000000e+00 : f32
    %74 = vector.broadcast %cst_21 : f32 to vector<2x32xf32>
    %75 = arith.addf %74, %73 : vector<2x32xf32>
    %76 = arith.divf %74, %75 : vector<2x32xf32>
    %c0_22 = arith.constant 0 : index
    %c0_23 = arith.constant 0 : index
    %77 = vector.load %arg7[%c0_22, %c0_23] : memref<32x4xf32, #tpu.memory_space<vmem>>, vector<32x4xf32>
    %cst_24 = arith.constant dense<0.000000e+00> : vector<2x4xf32>
    %78 = tpu.matmul %76, %77, %cst_24 {dimension_numbers = #tpu.dot_dimension_numbers<[1], [0], [0], [1], [0, 0, 1, 1], [], []>} : vector<2x32xf32>, vector<32x4xf32>, vector<2x4xf32> -> vector<2x4xf32>
    %c0_25 = arith.constant 0 : index
    %c0_26 = arith.constant 0 : index
    %79 = vector.load %arg8[%c0_25, %c0_26] : memref<1x4xf32, #tpu.memory_space<vmem>>, vector<1x4xf32>
    %80 = vector.broadcast %79 : vector<1x4xf32> to vector<2x4xf32>
    %81 = arith.addf %78, %80 : vector<2x4xf32>
    %c0_27 = arith.constant 0 : index
    %c0_28 = arith.constant 0 : index
    %82 = vector.load %arg9[%c0_27, %c0_28] : memref<2x4xf32, #tpu.memory_space<vmem>>, vector<2x4xf32>
    tpu.vector_store %arg9[%c0_27, %c0_28], %81 {strides = array<i32>} : memref<2x4xf32, #tpu.memory_space<vmem>>, vector<2x4xf32>,
    return
  }
}

</mosaic_0001>

<llo_original>
// kernel: simple_gru_forward.1
$region0: #{simple_gru_forward.1}
  #allocation0 [shape = 'u32[]', space=smem, size = 0x4, offset = 0x4, fixed_abs, tag = 'smem constant byte address 0x4 - core index']
  #allocation1 [shape = 'u32[144,128]{1,0:T(1,128)}', space=vmem, size = 0x12000, scoped, tag = 'internal scratch']
  %s0 = inlined_call_operand.vmem [shape: f32[2,16], index: 0, kind: input, shape index: {}]
  %s1 = inlined_call_operand.vmem [shape: f32[16,384], index: 1, kind: input, shape index: {}]
  %s2 = inlined_call_operand.vmem [shape: f32[4,128], index: 2, kind: input, shape index: {}]
  %s3 = inlined_call_operand.hbm [shape: f32[128,384], index: 3, kind: input, shape index: {}]
  %s4 = inlined_call_operand.vmem [shape: f32[4,128], index: 4, kind: input, shape index: {}]
  %s5 = inlined_call_operand.vmem [shape: f32[128,32], index: 5, kind: input, shape index: {}]
  %s6 = inlined_call_operand.vmem [shape: f32[1,32], index: 6, kind: input, shape index: {}]
  %s7 = inlined_call_operand.vmem [shape: f32[32,4], index: 7, kind: input, shape index: {}]
  %s8 = inlined_call_operand.vmem [shape: f32[1,4], index: 8, kind: input, shape index: {}]
  %s9 = inlined_call_operand.hbm [shape: f32[2,4], index: 9, kind: output, shape index: {}]
  %s10 = sld [smem:[#allocation0]]
  $region50: #{simple_gru_forward.1} parent=0
    _
  %s12 = ssub.s32 1, %s10
  %s13 = scalar_select 0, %s12, %s10
  $region1: #{simple_gru_forward.1} parent=0
    #allocation2 [shape = 'u8[196608]{0}', space=vmem, size = 0x30000, scoped, tag = 'input window, operand 3, single buffered']
    #allocation3 [shape = 's32[1]{0}', space=sflag, size = 0x4, scoped, tag = 'scoped memory for simple_gru_forward.1']
    #allocation4 [shape = 's32[1]{0}', space=sflag, size = 0x4, scoped, tag = 'scoped memory for simple_gru_forward.1']
    #allocation5 [shape = 'u8[1024]{0}', space=vmem, size = 0x400, scoped, tag = 'output window, operand 0, single buffered']
    %14 = vsyncpa [#allocation3], 0
    %15 = vsyncpa [#allocation4], 0
    // Predicated region
    $region2: #{simple_gru_forward.1} parent=1 // pred_check
      _
    $region3: #{simple_gru_forward.1} parent=1 // pred_check_branch
      %17 = sbr.rel (0) target = $region5
    $region4: #{simple_gru_forward.1} parent=1 // pred_region
      _
    $region5: #{simple_gru_forward.1} parent=1 // pred_fallthru
      _
    // Predicated region
    $region6: #{simple_gru_forward.1} parent=1 // pred_check
      _
    $region7: #{simple_gru_forward.1} parent=1 // pred_check_branch
      %19 = sbr.rel (0) target = $region9
    $region8: #{simple_gru_forward.1} parent=1 // pred_region
      _
    $region9: #{simple_gru_forward.1} parent=1 // pred_fallthru
      _
    // Predicated region
    $region10: #{simple_gru_forward.1} parent=1 // pred_check
      _
    $region11: #{simple_gru_forward.1} parent=1 // pred_check_branch
      %21 = sbr.rel (0) target = $region13
    $region12: #{simple_gru_forward.1} parent=1 // pred_region
      _
    $region13: #{simple_gru_forward.1} parent=1 // pred_fallthru
      _
    // Predicated region
    $region14: #{simple_gru_forward.1} parent=1 // pred_check
      _
    $region15: #{simple_gru_forward.1} parent=1 // pred_check_branch
      %23 = sbr.rel (0) target = $region17
    $region16: #{simple_gru_forward.1} parent=1 // pred_region
      %s25 = ssub.s32 6144, 6144
      %26 = vsyncadd [#allocation3], %s25
      %s27 = sshll.u32 [#allocation2], 4
      %s28 = int_to_ptr.vmem [resolvable:$true] %s27
      %33 = dma.hbm_to_vmem [thread:$0]  %s3, 6144, %s28, [#allocation3], 384, 384, 24
    $region17: #{simple_gru_forward.1} parent=1 // pred_fallthru
      _
    // Predicated region
    $region18: #{simple_gru_forward.1} parent=1 // pred_check
      _
    $region19: #{simple_gru_forward.1} parent=1 // pred_check_branch
      %35 = sbr.rel (0) target = $region21
    $region20: #{simple_gru_forward.1} parent=1 // pred_region
      _
    $region21: #{simple_gru_forward.1} parent=1 // pred_fallthru
      _
    // Predicated region
    $region22: #{simple_gru_forward.1} parent=1 // pred_check
      _
    $region23: #{simple_gru_forward.1} parent=1 // pred_check_branch
      %37 = sbr.rel (0) target = $region25
    $region24: #{simple_gru_forward.1} parent=1 // pred_region
      _
    $region25: #{simple_gru_forward.1} parent=1 // pred_fallthru
      _
    // Predicated region
    $region26: #{simple_gru_forward.1} parent=1 // pred_check
      _
    $region27: #{simple_gru_forward.1} parent=1 // pred_check_branch
      %39 = sbr.rel (0) target = $region29
    $region28: #{simple_gru_forward.1} parent=1 // pred_region
      _
    $region29: #{simple_gru_forward.1} parent=1 // pred_fallthru
      _
    // Predicated region
    $region30: #{simple_gru_forward.1} parent=1 // pred_check
      _
    $region31: #{simple_gru_forward.1} parent=1 // pred_check_branch
      %41 = sbr.rel (0) target = $region33
    $region32: #{simple_gru_forward.1} parent=1 // pred_region
      _
    $region33: #{simple_gru_forward.1} parent=1 // pred_fallthru
      _
    // Predicated region
    $region34: #{simple_gru_forward.1} parent=1 // pred_check
      _
    $region35: #{simple_gru_forward.1} parent=1 // pred_check_branch
      %43 = sbr.rel (0) target = $region37
    $region36: #{simple_gru_forward.1} parent=1 // pred_region
      _
    $region37: #{simple_gru_forward.1} parent=1 // pred_fallthru
      _
    // Predicated region
    $region38: #{simple_gru_forward.1} parent=1 // pred_check
      _
    $region39: #{simple_gru_forward.1} parent=1 // pred_check_branch
      %45 = sbr.rel (0) target = $region41
    $region40: #{simple_gru_forward.1} parent=1 // pred_region
      %46 = dma.done [#allocation3], 6144
    $region41: #{simple_gru_forward.1} parent=1 // pred_fallthru
      _
    %v47 = vld [vmem:[%s0] sm:$0x3]
    %v48 = vld [vmem:[%s1] sm:$0xff]
    %v49 = vld [vmem:[%s1 + $0x8] sm:$0xff]
    %v50 = vld [vmem:[%s1 + $0x10] sm:$0xff]
    %v51 = vld [vmem:[%s1 + $0x18] sm:$0xff]
    %v52 = vld [vmem:[%s1 + $0x20] sm:$0xff]
    %v53 = vld [vmem:[%s1 + $0x28] sm:$0xff]
    %vm54 = vcmask 130048
    %v56 = vsel %vm54, %v47, 0
    %58 = vmatprep.subr.mxu0 %v49
    %59 = vmatpush1.msra.mxu0 %v48
    %60 = vmatprep.subr.mxu0 %v52
    %61 = vmatpush1.msra.mxu0 %v51
    %62 = vmatprep.subr.mxu0 0.0
    %63 = vmatpush1.msra.mxu0 0.0
    %64 = vmatprep.subr.mxu0 0.0
    %65 = vmatpush1.msra.mxu0 0.0
    %66 = vmatprep.subr.mxu0 0.0
    %67 = vmatpush1.msra.mxu0 0.0
    %68 = vmatprep.subr.mxu0 0.0
    %69 = vmatpush1.msra.mxu0 0.0
    %70 = vmatprep.subr.mxu0 0.0
    %71 = vmatpush1.msra.mxu0 0.0
    %72 = vmatprep.subr.mxu0 0.0
    %73 = vmatpush1.msra.mxu0 0.0
    %74 = vmatprep.subr.mxu0 0.0
    %75 = vmatpush1.msra.mxu0 0.0
    %76 = vmatprep.subr.mxu0 0.0
    %77 = vmatpush1.msra.mxu0 0.0
    %78 = vmatprep.subr.mxu0 0.0
    %79 = vmatpush1.msra.mxu0 0.0
    %80 = vmatprep.subr.mxu0 0.0
    %81 = vmatpush1.msra.mxu0 0.0
    %82 = vmatprep.subr.mxu0 0.0
    %83 = vmatpush1.msra.mxu0 0.0
    %84 = vmatprep.subr.mxu0 0.0
    %85 = vmatpush1.msra.mxu0 0.0
    %86 = vmatprep.subr.mxu0 0.0
    %87 = vmatpush1.msra.mxu0 0.0
    %88 = vmatprep.subr.mxu0 0.0
    %89 = vmatpush1.msra.mxu0 0.0
    %90 = vmatprep.subr.mxu0 0.0
    %91 = vmatpush1.msra.mxu0 0.0
    %92 = vmatprep.subr.mxu0 0.0
    %93 = vmatpush1.msra.mxu0 0.0
    %94 = vmatprep.subr.mxu0 0.0
    %95 = vmatpush1.msra.mxu0 0.0
    %96 = vmatprep.subr.mxu0 0.0
    %97 = vmatpush1.msra.mxu0 0.0
    %98 = vmatprep.subr.mxu0 0.0
    %99 = vmatpush1.msra.mxu0 0.0
    %100 = vmatprep.subr.mxu0 0.0
    %101 = vmatpush1.msra.mxu0 0.0
    %102 = vmatprep.subr.mxu0 0.0
    %103 = vmatpush1.msra.mxu0 0.0
    %104 = vmatprep.subr.mxu0 0.0
    %105 = vmatpush1.msra.mxu0 0.0
    %106 = vmatprep.subr.mxu0 0.0
    %107 = vmatpush1.msra.mxu0 0.0
    %108 = vmatprep.subr.mxu0 0.0
    %109 = vmatpush1.msra.mxu0 0.0
    %110 = vmatprep.subr.mxu0 0.0
    %111 = vmatpush1.msra.mxu0 0.0
    %112 = vmatprep.subr.mxu0 0.0
    %113 = vmatpush1.msra.mxu0 0.0
    %114 = vmatprep.subr.mxu0 0.0
    %115 = vmatpush1.msra.mxu0 0.0
    %116 = vmatprep.subr.mxu0 0.0
    %117 = vmatpush1.msra.mxu0 0.0
    %118 = vmatprep.subr.mxu0 0.0
    %119 = vmatpush1.msra.mxu0 0.0
    %120 = vmatprep.subr.mxu0 0.0
    %121 = vmatpush1.msra.mxu0 0.0
    %122 = vmatprep.mubr.f32.mxu0 0.0
    %123 = vmatmul.mubr.f32.gmra.mrb[0].mxu0 %v56
    %v124 = vpop.f32.mrb[0].mxu0
    %v125 = vadd.f32 0.0, %v124
    %v126 = vpop.f32.mrb[0].mxu0
    %v127 = vadd.f32 0.0, %v126
    %128 = vdwg.mxu0
    %129 = vmatprep.subr.mxu0 0.0
    %130 = vmatpush1.msra.mxu0 %v50
    %131 = vmatprep.subr.mxu0 0.0
    %132 = vmatpush1.msra.mxu0 %v53
    %133 = vmatprep.subr.mxu0 0.0
    %134 = vmatpush1.msra.mxu0 0.0
    %135 = vmatprep.subr.mxu0 0.0
    %136 = vmatpush1.msra.mxu0 0.0
    %137 = vmatprep.subr.mxu0 0.0
    %138 = vmatpush1.msra.mxu0 0.0
    %139 = vmatprep.subr.mxu0 0.0
    %140 = vmatpush1.msra.mxu0 0.0
    %141 = vmatprep.subr.mxu0 0.0
    %142 = vmatpush1.msra.mxu0 0.0
    %143 = vmatprep.subr.mxu0 0.0
    %144 = vmatpush1.msra.mxu0 0.0
    %145 = vmatprep.subr.mxu0 0.0
    %146 = vmatpush1.msra.mxu0 0.0
    %147 = vmatprep.subr.mxu0 0.0
    %148 = vmatpush1.msra.mxu0 0.0
    %149 = vmatprep.subr.mxu0 0.0
    %150 = vmatpush1.msra.mxu0 0.0
    %151 = vmatprep.subr.mxu0 0.0
    %152 = vmatpush1.msra.mxu0 0.0
    %153 = vmatprep.subr.mxu0 0.0
    %154 = vmatpush1.msra.mxu0 0.0
    %155 = vmatprep.subr.mxu0 0.0
    %156 = vmatpush1.msra.mxu0 0.0
    %157 = vmatprep.subr.mxu0 0.0
    %158 = vmatpush1.msra.mxu0 0.0
    %159 = vmatprep.subr.mxu0 0.0
    %160 = vmatpush1.msra.mxu0 0.0
    %161 = vmatprep.subr.mxu0 0.0
    %162 = vmatpush1.msra.mxu0 0.0
    %163 = vmatprep.subr.mxu0 0.0
    %164 = vmatpush1.msra.mxu0 0.0
    %165 = vmatprep.subr.mxu0 0.0
    %166 = vmatpush1.msra.mxu0 0.0
    %167 = vmatprep.subr.mxu0 0.0
    %168 = vmatpush1.msra.mxu0 0.0
    %169 = vmatprep.subr.mxu0 0.0
    %170 = vmatpush1.msra.mxu0 0.0
    %171 = vmatprep.subr.mxu0 0.0
    %172 = vmatpush1.msra.mxu0 0.0
    %173 = vmatprep.subr.mxu0 0.0
    %174 = vmatpush1.msra.mxu0 0.0
    %175 = vmatprep.subr.mxu0 0.0
    %176 = vmatpush1.msra.mxu0 0.0
    %177 = vmatprep.subr.mxu0 0.0
    %178 = vmatpush1.msra.mxu0 0.0
    %179 = vmatprep.subr.mxu0 0.0
    %180 = vmatpush1.msra.mxu0 0.0
    %181 = vmatprep.subr.mxu0 0.0
    %182 = vmatpush1.msra.mxu0 0.0
    %183 = vmatprep.subr.mxu0 0.0
    %184 = vmatpush1.msra.mxu0 0.0
    %185 = vmatprep.subr.mxu0 0.0
    %186 = vmatpush1.msra.mxu0 0.0
    %187 = vmatprep.subr.mxu0 0.0
    %188 = vmatpush1.msra.mxu0 0.0
    %189 = vmatprep.subr.mxu0 0.0
    %190 = vmatpush1.msra.mxu0 0.0
    %191 = vmatprep.subr.mxu0 0.0
    %192 = vmatpush1.msra.mxu0 0.0
    %193 = vmatprep.mubr.f32.mxu0 0.0
    %194 = vmatmul.mubr.f32.gmra.mrb[0].mxu0 %v56
    %v195 = vpop.f32.mrb[0].mxu0
    %v196 = vadd.f32 0.0, %v195
    %v197 = vpop.f32.mrb[0].mxu0
    %198 = vdwg.mxu0
    %v199 = vld [vmem:[%s2] sm:$0xf]
    %v200 = vlaneseq
    %v201 = vshrl.u32 %v200, 7
    %v202 = vsub.s32 0, %v201
    %v203 = vrot.slane %v199, %v202
    %v204 = vadd.f32 %v125, %v203
    %v205 = vxor.u32 %v204, 2147483648
    %v206 = vmul.f32 %v205, 1.442695
    %v207 = vpow.pop %v206
    %v208 = vadd.f32 %v207, 1.0
    %v209 = vrcp.pop %v208
    %v210 = vmul.f32 1.0, %v209
    %v211 = vlaneseq
    %v212 = vshrl.u32 %v211, 7
    %v213 = vsub.s32 1, %v212
    %v214 = vrot.slane %v199, %v213
    %v215 = vadd.f32 %v127, %v214
    %v216 = vxor.u32 %v215, 2147483648
    %v217 = vmul.f32 %v216, 1.442695
    %v218 = vpow.pop %v217
    %v219 = vadd.f32 %v218, 1.0
    %v220 = vrcp.pop %v219
    %v221 = vmul.f32 1.0, %v220
    %v222 = vlaneseq
    %v223 = vshrl.u32 %v222, 7
    %v224 = vsub.s32 2, %v223
    %v225 = vrot.slane %v199, %v224
    %v226 = vadd.f32 %v196, %v225
    %v227 = vlaneseq
    %v228 = vshrl.u32 %v227, 7
    %v229 = vsub.s32 3, %v228
    %v230 = vrot.slane %v199, %v229
    %v231 = vmul.f32 %v210, %v230
    %v232 = vadd.f32 %v226, %v231
    %v233 = vtanh.pop %v232
    %v234 = vsub.f32 1.0, %v221
    %v235 = vmul.f32 %v234, %v233
    %v236 = vld [vmem:[#allocation2] sm:$0xff]
    %v237 = vld [vmem:[#allocation2 + $0x8] sm:$0xff]
    %v238 = vld [vmem:[#allocation2 + $0x10] sm:$0xff]
    %v239 = vld [vmem:[#allocation2 + $0x18] sm:$0xff]
    %v240 = vld [vmem:[#allocation2 + $0x20] sm:$0xff]
    %v241 = vld [vmem:[#allocation2 + $0x28] sm:$0xff]
    %v242 = vld [vmem:[#allocation2 + $0x30] sm:$0xff]
    %v243 = vld [vmem:[#allocation2 + $0x38] sm:$0xff]
    %v244 = vld [vmem:[#allocation2 + $0x40] sm:$0xff]
    %v245 = vld [vmem:[#allocation2 + $0x48] sm:$0xff]
    %v246 = vld [vmem:[#allocation2 + $0x50] sm:$0xff]
    %v247 = vld [vmem:[#allocation2 + $0x58] sm:$0xff]
    %v248 = vld [vmem:[#allocation2 + $0x60] sm:$0xff]
    %v249 = vld [vmem:[#allocation2 + $0x68] sm:$0xff]
    %v250 = vld [vmem:[#allocation2 + $0x70] sm:$0xff]
    %v251 = vld [vmem:[#allocation2 + $0x78] sm:$0xff]
    %v252 = vld [vmem:[#allocation2 + $0x80] sm:$0xff]
    %v253 = vld [vmem:[#allocation2 + $0x88] sm:$0xff]
    %v254 = vld [vmem:[#allocation2 + $0x90] sm:$0xff]
    %v255 = vld [vmem:[#allocation2 + $0x98] sm:$0xff]
    %v256 = vld [vmem:[#allocation2 + $0xa0] sm:$0xff]
    %v257 = vld [vmem:[#allocation2 + $0xa8] sm:$0xff]
    %v258 = vld [vmem:[#allocation2 + $0xb0] sm:$0xff]
    %v259 = vld [vmem:[#allocation2 + $0xb8] sm:$0xff]
    %v260 = vld [vmem:[#allocation2 + $0xc0] sm:$0xff]
    %v261 = vld [vmem:[#allocation2 + $0xc8] sm:$0xff]
    %v262 = vld [vmem:[#allocation2 + $0xd0] sm:$0xff]
    %v263 = vld [vmem:[#allocation2 + $0xd8] sm:$0xff]
    %v264 = vld [vmem:[#allocation2 + $0xe0] sm:$0xff]
    %v265 = vld [vmem:[#allocation2 + $0xe8] sm:$0xff]
    %v266 = vld [vmem:[#allocation2 + $0xf0] sm:$0xff]
    %v267 = vld [vmem:[#allocation2 + $0xf8] sm:$0xff]
    %v268 = vld [vmem:[#allocation2 + $0x100] sm:$0xff]
    %v269 = vld [vmem:[#allocation2 + $0x108] sm:$0xff]
    %v270 = vld [vmem:[#allocation2 + $0x110] sm:$0xff]
    %v271 = vld [vmem:[#allocation2 + $0x118] sm:$0xff]
    %v272 = vld [vmem:[#allocation2 + $0x120] sm:$0xff]
    %v273 = vld [vmem:[#allocation2 + $0x128] sm:$0xff]
    %v274 = vld [vmem:[#allocation2 + $0x130] sm:$0xff]
    %v275 = vld [vmem:[#allocation2 + $0x138] sm:$0xff]
    %v276 = vld [vmem:[#allocation2 + $0x140] sm:$0xff]
    %v277 = vld [vmem:[#allocation2 + $0x148] sm:$0xff]
    %v278 = vld [vmem:[#allocation2 + $0x150] sm:$0xff]
    %v279 = vld [vmem:[#allocation2 + $0x158] sm:$0xff]
    %v280 = vld [vmem:[#allocation2 + $0x160] sm:$0xff]
    %v281 = vld [vmem:[#allocation2 + $0x168] sm:$0xff]
    %v282 = vld [vmem:[#allocation2 + $0x170] sm:$0xff]
    %v283 = vld [vmem:[#allocation2 + $0x178] sm:$0xff]
    %284 = vmatprep.subr.mxu0 %v237
    %285 = vmatpush1.msra.mxu0 %v236
    %286 = vmatprep.subr.mxu0 %v240
    %287 = vmatpush1.msra.mxu0 %v239
    %288 = vmatprep.subr.mxu0 %v243
    %289 = vmatpush1.msra.mxu0 %v242
    %290 = vmatprep.subr.mxu0 %v246
    %291 = vmatpush1.msra.mxu0 %v245
    %292 = vmatprep.subr.mxu0 %v249
    %293 = vmatpush1.msra.mxu0 %v248
    %294 = vmatprep.subr.mxu0 %v252
    %295 = vmatpush1.msra.mxu0 %v251
    %296 = vmatprep.subr.mxu0 %v255
    %297 = vmatpush1.msra.mxu0 %v254
    %298 = vmatprep.subr.mxu0 %v258
    %299 = vmatpush1.msra.mxu0 %v257
    %300 = vmatprep.subr.mxu0 %v261
    %301 = vmatpush1.msra.mxu0 %v260
    %302 = vmatprep.subr.mxu0 %v264
    %303 = vmatpush1.msra.mxu0 %v263
    %304 = vmatprep.subr.mxu0 %v267
    %305 = vmatpush1.msra.mxu0 %v266
    %306 = vmatprep.subr.mxu0 %v270
    %307 = vmatpush1.msra.mxu0 %v269
    %308 = vmatprep.subr.mxu0 %v273
    %309 = vmatpush1.msra.mxu0 %v272
    %310 = vmatprep.subr.mxu0 %v276
    %311 = vmatpush1.msra.mxu0 %v275
    %312 = vmatprep.subr.mxu0 %v279
    %313 = vmatpush1.msra.mxu0 %v278
    %314 = vmatprep.subr.mxu0 %v282
    %315 = vmatpush1.msra.mxu0 %v281
    %316 = vmatprep.subr.mxu0 0.0
    %317 = vmatpush1.msra.mxu0 0.0
    %318 = vmatprep.subr.mxu0 0.0
    %319 = vmatpush1.msra.mxu0 0.0
    %320 = vmatprep.subr.mxu0 0.0
    %321 = vmatpush1.msra.mxu0 0.0
    %322 = vmatprep.subr.mxu0 0.0
    %323 = vmatpush1.msra.mxu0 0.0
    %324 = vmatprep.subr.mxu0 0.0
    %325 = vmatpush1.msra.mxu0 0.0
    %326 = vmatprep.subr.mxu0 0.0
    %327 = vmatpush1.msra.mxu0 0.0
    %328 = vmatprep.subr.mxu0 0.0
    %329 = vmatpush1.msra.mxu0 0.0
    %330 = vmatprep.subr.mxu0 0.0
    %331 = vmatpush1.msra.mxu0 0.0
    %332 = vmatprep.subr.mxu0 0.0
    %333 = vmatpush1.msra.mxu0 0.0
    %334 = vmatprep.subr.mxu0 0.0
    %335 = vmatpush1.msra.mxu0 0.0
    %336 = vmatprep.subr.mxu0 0.0
    %337 = vmatpush1.msra.mxu0 0.0
    %338 = vmatprep.subr.mxu0 0.0
    %339 = vmatpush1.msra.mxu0 0.0
    %340 = vmatprep.subr.mxu0 0.0
    %341 = vmatpush1.msra.mxu0 0.0
    %342 = vmatprep.subr.mxu0 0.0
    %343 = vmatpush1.msra.mxu0 0.0
    %344 = vmatprep.subr.mxu0 0.0
    %345 = vmatpush1.msra.mxu0 0.0
    %346 = vmatprep.subr.mxu0 0.0
    %347 = vmatpush1.msra.mxu0 0.0
    %348 = vmatprep.mubr.f32.mxu0 0.0
    %349 = vmatmul.mubr.f32.gmra.mrb[0].mxu0 %v235
    %v350 = vpop.f32.mrb[0].mxu0
    %v351 = vadd.f32 0.0, %v350
    %v352 = vpop.f32.mrb[0].mxu0
    %v353 = vadd.f32 0.0, %v352
    %354 = vdwg.mxu0
    %355 = vmatprep.subr.mxu0 0.0
    %356 = vmatpush1.msra.mxu0 %v238
    %357 = vmatprep.subr.mxu0 0.0
    %358 = vmatpush1.msra.mxu0 %v241
    %359 = vmatprep.subr.mxu0 0.0
    %360 = vmatpush1.msra.mxu0 %v244
    %361 = vmatprep.subr.mxu0 0.0
    %362 = vmatpush1.msra.mxu0 %v247
    %363 = vmatprep.subr.mxu0 0.0
    %364 = vmatpush1.msra.mxu0 %v250
    %365 = vmatprep.subr.mxu0 0.0
    %366 = vmatpush1.msra.mxu0 %v253
    %367 = vmatprep.subr.mxu0 0.0
    %368 = vmatpush1.msra.mxu0 %v256
    %369 = vmatprep.subr.mxu0 0.0
    %370 = vmatpush1.msra.mxu0 %v259
    %371 = vmatprep.subr.mxu0 0.0
    %372 = vmatpush1.msra.mxu0 %v262
    %373 = vmatprep.subr.mxu0 0.0
    %374 = vmatpush1.msra.mxu0 %v265
    %375 = vmatprep.subr.mxu0 0.0
    %376 = vmatpush1.msra.mxu0 %v268
    %377 = vmatprep.subr.mxu0 0.0
    %378 = vmatpush1.msra.mxu0 %v271
    %379 = vmatprep.subr.mxu0 0.0
    %380 = vmatpush1.msra.mxu0 %v274
    %381 = vmatprep.subr.mxu0 0.0
    %382 = vmatpush1.msra.mxu0 %v277
    %383 = vmatprep.subr.mxu0 0.0
    %384 = vmatpush1.msra.mxu0 %v280
    %385 = vmatprep.subr.mxu0 0.0
    %386 = vmatpush1.msra.mxu0 %v283
    %387 = vmatprep.subr.mxu0 0.0
    %388 = vmatpush1.msra.mxu0 0.0
    %389 = vmatprep.subr.mxu0 0.0
    %390 = vmatpush1.msra.mxu0 0.0
    %391 = vmatprep.subr.mxu0 0.0
    %392 = vmatpush1.msra.mxu0 0.0
    %393 = vmatprep.subr.mxu0 0.0
    %394 = vmatpush1.msra.mxu0 0.0
    %395 = vmatprep.subr.mxu0 0.0
    %396 = vmatpush1.msra.mxu0 0.0
    %397 = vmatprep.subr.mxu0 0.0
    %398 = vmatpush1.msra.mxu0 0.0
    %399 = vmatprep.subr.mxu0 0.0
    %400 = vmatpush1.msra.mxu0 0.0
    %401 = vmatprep.subr.mxu0 0.0
    %402 = vmatpush1.msra.mxu0 0.0
    %403 = vmatprep.subr.mxu0 0.0
    %404 = vmatpush1.msra.mxu0 0.0
    %405 = vmatprep.subr.mxu0 0.0
    %406 = vmatpush1.msra.mxu0 0.0
    %407 = vmatprep.subr.mxu0 0.0
    %408 = vmatpush1.msra.mxu0 0.0
    %409 = vmatprep.subr.mxu0 0.0
    %410 = vmatpush1.msra.mxu0 0.0
    %411 = vmatprep.subr.mxu0 0.0
    %412 = vmatpush1.msra.mxu0 0.0
    %413 = vmatprep.subr.mxu0 0.0
    %414 = vmatpush1.msra.mxu0 0.0
    %415 = vmatprep.subr.mxu0 0.0
    %416 = vmatpush1.msra.mxu0 0.0
    %417 = vmatprep.subr.mxu0 0.0
    %418 = vmatpush1.msra.mxu0 0.0
    %419 = vmatprep.mubr.f32.mxu0 0.0
    %420 = vmatmul.mubr.f32.gmra.mrb[0].mxu0 %v235
    %v421 = vpop.f32.mrb[0].mxu0
    %v422 = vadd.f32 0.0, %v421
    %v423 = vpop.f32.mrb[0].mxu0
    %424 = vdwg.mxu0
    %v425 = vld [vmem:[%s4] sm:$0xf]
    %v426 = vlaneseq
    %v427 = vshrl.u32 %v426, 7
    %v428 = vsub.s32 0, %v427
    %v429 = vrot.slane %v425, %v428
    %v430 = vadd.f32 %v351, %v429
    %v431 = vxor.u32 %v430, 2147483648
    %v432 = vmul.f32 %v431, 1.442695
    %v433 = vpow.pop %v432
    %v434 = vadd.f32 %v433, 1.0
    %v435 = vrcp.pop %v434
    %v436 = vmul.f32 1.0, %v435
    %v437 = vlaneseq
    %v438 = vshrl.u32 %v437, 7
    %v439 = vsub.s32 1, %v438
    %v440 = vrot.slane %v425, %v439
    %v441 = vadd.f32 %v353, %v440
    %v442 = vxor.u32 %v441, 2147483648
    %v443 = vmul.f32 %v442, 1.442695
    %v444 = vpow.pop %v443
    %v445 = vadd.f32 %v444, 1.0
    %v446 = vrcp.pop %v445
    %v447 = vmul.f32 1.0, %v446
    %v448 = vlaneseq
    %v449 = vshrl.u32 %v448, 7
    %v450 = vsub.s32 2, %v449
    %v451 = vrot.slane %v425, %v450
    %v452 = vadd.f32 %v422, %v451
    %v453 = vlaneseq
    %v454 = vshrl.u32 %v453, 7
    %v455 = vsub.s32 3, %v454
    %v456 = vrot.slane %v425, %v455
    %v457 = vmul.f32 %v436, %v456
    %v458 = vadd.f32 %v452, %v457
    %v459 = vtanh.pop %v458
    %v460 = vsub.f32 1.0, %v447
    %v461 = vmul.f32 %v460, %v459
    %v462 = vld [vmem:[%s5] sm:$0xff]
    %v463 = vld [vmem:[%s5 + $0x8] sm:$0xff]
    %v464 = vld [vmem:[%s5 + $0x10] sm:$0xff]
    %v465 = vld [vmem:[%s5 + $0x18] sm:$0xff]
    %v466 = vld [vmem:[%s5 + $0x20] sm:$0xff]
    %v467 = vld [vmem:[%s5 + $0x28] sm:$0xff]
    %v468 = vld [vmem:[%s5 + $0x30] sm:$0xff]
    %v469 = vld [vmem:[%s5 + $0x38] sm:$0xff]
    %v470 = vld [vmem:[%s5 + $0x40] sm:$0xff]
    %v471 = vld [vmem:[%s5 + $0x48] sm:$0xff]
    %v472 = vld [vmem:[%s5 + $0x50] sm:$0xff]
    %v473 = vld [vmem:[%s5 + $0x58] sm:$0xff]
    %v474 = vld [vmem:[%s5 + $0x60] sm:$0xff]
    %v475 = vld [vmem:[%s5 + $0x68] sm:$0xff]
    %v476 = vld [vmem:[%s5 + $0x70] sm:$0xff]
    %v477 = vld [vmem:[%s5 + $0x78] sm:$0xff]
    %v478 = vld [vmem:[%s6] sm:$0x1]
    %v480 = vlaneseq
    %v481 = vshrl.u32 %v480, 7
    %v482 = vsub.s32 0, %v481
    %v483 = vrot.slane %v478, %v482
    %485 = vmatprep.subr.mxu0 0.0
    %486 = vmatpush1.msra.mxu0 %v462
    %487 = vmatprep.subr.mxu0 0.0
    %488 = vmatpush1.msra.mxu0 %v463
    %489 = vmatprep.subr.mxu0 0.0
    %490 = vmatpush1.msra.mxu0 %v464
    %491 = vmatprep.subr.mxu0 0.0
    %492 = vmatpush1.msra.mxu0 %v465
    %493 = vmatprep.subr.mxu0 0.0
    %494 = vmatpush1.msra.mxu0 %v466
    %495 = vmatprep.subr.mxu0 0.0
    %496 = vmatpush1.msra.mxu0 %v467
    %497 = vmatprep.subr.mxu0 0.0
    %498 = vmatpush1.msra.mxu0 %v468
    %499 = vmatprep.subr.mxu0 0.0
    %500 = vmatpush1.msra.mxu0 %v469
    %501 = vmatprep.subr.mxu0 0.0
    %502 = vmatpush1.msra.mxu0 %v470
    %503 = vmatprep.subr.mxu0 0.0
    %504 = vmatpush1.msra.mxu0 %v471
    %505 = vmatprep.subr.mxu0 0.0
    %506 = vmatpush1.msra.mxu0 %v472
    %507 = vmatprep.subr.mxu0 0.0
    %508 = vmatpush1.msra.mxu0 %v473
    %509 = vmatprep.subr.mxu0 0.0
    %510 = vmatpush1.msra.mxu0 %v474
    %511 = vmatprep.subr.mxu0 0.0
    %512 = vmatpush1.msra.mxu0 %v475
    %513 = vmatprep.subr.mxu0 0.0
    %514 = vmatpush1.msra.mxu0 %v476
    %515 = vmatprep.subr.mxu0 0.0
    %516 = vmatpush1.msra.mxu0 %v477
    %517 = vmatprep.subr.mxu0 0.0
    %518 = vmatpush1.msra.mxu0 0.0
    %519 = vmatprep.subr.mxu0 0.0
    %520 = vmatpush1.msra.mxu0 0.0
    %521 = vmatprep.subr.mxu0 0.0
    %522 = vmatpush1.msra.mxu0 0.0
    %523 = vmatprep.subr.mxu0 0.0
    %524 = vmatpush1.msra.mxu0 0.0
    %525 = vmatprep.subr.mxu0 0.0
    %526 = vmatpush1.msra.mxu0 0.0
    %527 = vmatprep.subr.mxu0 0.0
    %528 = vmatpush1.msra.mxu0 0.0
    %529 = vmatprep.subr.mxu0 0.0
    %530 = vmatpush1.msra.mxu0 0.0
    %531 = vmatprep.subr.mxu0 0.0
    %532 = vmatpush1.msra.mxu0 0.0
    %533 = vmatprep.subr.mxu0 0.0
    %534 = vmatpush1.msra.mxu0 0.0
    %535 = vmatprep.subr.mxu0 0.0
    %536 = vmatpush1.msra.mxu0 0.0
    %537 = vmatprep.subr.mxu0 0.0
    %538 = vmatpush1.msra.mxu0 0.0
    %539 = vmatprep.subr.mxu0 0.0
    %540 = vmatpush1.msra.mxu0 0.0
    %541 = vmatprep.subr.mxu0 0.0
    %542 = vmatpush1.msra.mxu0 0.0
    %543 = vmatprep.subr.mxu0 0.0
    %544 = vmatpush1.msra.mxu0 0.0
    %545 = vmatprep.subr.mxu0 0.0
    %546 = vmatpush1.msra.mxu0 0.0
    %547 = vmatprep.subr.mxu0 0.0
    %548 = vmatpush1.msra.mxu0 0.0
    %549 = vmatprep.mubr.f32.mxu0 0.0
    %550 = vmatmul.mubr.f32.gmra.mrb[0].mxu0 %v461
    %v551 = vpop.f32.mrb[0].mxu0
    %v552 = vadd.f32 %v483, %v551
    %v553 = vpop.f32.mrb[0].mxu0
    %554 = vdwg.mxu0
    %v555 = vxor.u32 %v552, 2147483648
    %v556 = vmul.f32 %v555, 1.442695
    %v557 = vpow.pop %v556
    %v558 = vadd.f32 %v557, 1.0
    %v559 = vrcp.pop %v558
    %v560 = vmul.f32 1.0, %v559
    %v561 = vld [vmem:[%s7] sm:$0xff]
    %v562 = vld [vmem:[%s7 + $0x8] sm:$0xff]
    %v563 = vld [vmem:[%s7 + $0x10] sm:$0xff]
    %v564 = vld [vmem:[%s7 + $0x18] sm:$0xff]
    %v565 = vld [vmem:[%s8] sm:$0x1]
    %v567 = vlaneseq
    %v568 = vshrl.u32 %v567, 7
    %v569 = vsub.s32 0, %v568
    %v570 = vrot.slane %v565, %v569
    %vm572 = vcmask 261120
    %v574 = vsel %vm572, %v560, 0
    %576 = vmatprep.subr.mxu0 0.0
    %577 = vmatpush1.msra.mxu0 %v561
    %578 = vmatprep.subr.mxu0 0.0
    %579 = vmatpush1.msra.mxu0 %v562
    %580 = vmatprep.subr.mxu0 0.0
    %581 = vmatpush1.msra.mxu0 %v563
    %582 = vmatprep.subr.mxu0 0.0
    %583 = vmatpush1.msra.mxu0 %v564
    %584 = vmatprep.subr.mxu0 0.0
    %585 = vmatpush1.msra.mxu0 0.0
    %586 = vmatprep.subr.mxu0 0.0
    %587 = vmatpush1.msra.mxu0 0.0
    %588 = vmatprep.subr.mxu0 0.0
    %589 = vmatpush1.msra.mxu0 0.0
    %590 = vmatprep.subr.mxu0 0.0
    %591 = vmatpush1.msra.mxu0 0.0
    %592 = vmatprep.subr.mxu0 0.0
    %593 = vmatpush1.msra.mxu0 0.0
    %594 = vmatprep.subr.mxu0 0.0
    %595 = vmatpush1.msra.mxu0 0.0
    %596 = vmatprep.subr.mxu0 0.0
    %597 = vmatpush1.msra.mxu0 0.0
    %598 = vmatprep.subr.mxu0 0.0
    %599 = vmatpush1.msra.mxu0 0.0
    %600 = vmatprep.subr.mxu0 0.0
    %601 = vmatpush1.msra.mxu0 0.0
    %602 = vmatprep.subr.mxu0 0.0
    %603 = vmatpush1.msra.mxu0 0.0
    %604 = vmatprep.subr.mxu0 0.0
    %605 = vmatpush1.msra.mxu0 0.0
    %606 = vmatprep.subr.mxu0 0.0
    %607 = vmatpush1.msra.mxu0 0.0
    %608 = vmatprep.subr.mxu0 0.0
    %609 = vmatpush1.msra.mxu0 0.0
    %610 = vmatprep.subr.mxu0 0.0
    %611 = vmatpush1.msra.mxu0 0.0
    %612 = vmatprep.subr.mxu0 0.0
    %613 = vmatpush1.msra.mxu0 0.0
    %614 = vmatprep.subr.mxu0 0.0
    %615 = vmatpush1.msra.mxu0 0.0
    %616 = vmatprep.subr.mxu0 0.0
    %617 = vmatpush1.msra.mxu0 0.0
    %618 = vmatprep.subr.mxu0 0.0
    %619 = vmatpush1.msra.mxu0 0.0
    %620 = vmatprep.subr.mxu0 0.0
    %621 = vmatpush1.msra.mxu0 0.0
    %622 = vmatprep.subr.mxu0 0.0
    %623 = vmatpush1.msra.mxu0 0.0
    %624 = vmatprep.subr.mxu0 0.0
    %625 = vmatpush1.msra.mxu0 0.0
    %626 = vmatprep.subr.mxu0 0.0
    %627 = vmatpush1.msra.mxu0 0.0
    %628 = vmatprep.subr.mxu0 0.0
    %629 = vmatpush1.msra.mxu0 0.0
    %630 = vmatprep.subr.mxu0 0.0
    %631 = vmatpush1.msra.mxu0 0.0
    %632 = vmatprep.subr.mxu0 0.0
    %633 = vmatpush1.msra.mxu0 0.0
    %634 = vmatprep.subr.mxu0 0.0
    %635 = vmatpush1.msra.mxu0 0.0
    %636 = vmatprep.subr.mxu0 0.0
    %637 = vmatpush1.msra.mxu0 0.0
    %638 = vmatprep.subr.mxu0 0.0
    %639 = vmatpush1.msra.mxu0 0.0
    %640 = vmatprep.mubr.f32.mxu0 0.0
    %641 = vmatmul.mubr.f32.gmra.mrb[0].mxu0 %v574
    %v642 = vpop.f32.mrb[0].mxu0
    %v643 = vadd.f32 %v570, %v642
    %v644 = vpop.f32.mrb[0].mxu0
    %645 = vdwg.mxu0
    %vm646 = vcmask 25600
    %647 = vst.msk [vmem:[#allocation5] sm:$0x3] %vm646, %v643
    // Predicated region
    $region42: #{simple_gru_forward.1} parent=1 // pred_check
      _
    $region43: #{simple_gru_forward.1} parent=1 // pred_check_branch
      %649 = sbr.rel (0) target = $region45
    $region44: #{simple_gru_forward.1} parent=1 // pred_region
      %s651 = ssub.s32 32, 32
      %652 = vsyncadd [#allocation4], %s651
      %s654 = sshll.u32 [#allocation5], 4
      %s655 = int_to_ptr.vmem [resolvable:$true] %s654
      %657 = dma.vmem_to_hbm [thread:$0]  %s655, 32, %s9, [#allocation4]
    $region45: #{simple_gru_forward.1} parent=1 // pred_fallthru
      _
    // Predicated region
    $region46: #{simple_gru_forward.1} parent=1 // pred_check
      _
    $region47: #{simple_gru_forward.1} parent=1 // pred_check_branch
      %659 = sbr.rel (0) target = $region49
    $region48: #{simple_gru_forward.1} parent=1 // pred_region
      %660 = dma.done [#allocation4], 32
    $region49: #{simple_gru_forward.1} parent=1 // pred_fallthru
      _
    %661 = vsyncpa [#allocation3], 1
    %662 = vsyncpa [#allocation4], 1

</llo_original>
